<compile_context>
chip_gen: v7x
topology: tpu7x:2x2x1
jax: 0.10.0
libtpu: 0.0.40
codegen_flags: <defaults>
</compile_context>

<pallas_src>
import functools

import jax
import jax.numpy as jnp
from jax.experimental import pallas as pl
from jax.experimental.pallas import tpu as pltpu


# -----------------------------------------------------------------------------
# Helpers
# -----------------------------------------------------------------------------
def _round_up(x, m):
    return (x + m - 1) // m * m


_SINGLE_BUFFER_OK = None


def _probe_copy_kernel(x_ref, o_ref):
    o_ref[...] = x_ref[...]


def _single_buffer_supported():
    """True if this jax build accepts pipeline_mode=pl.Buffered(1); probed once
    with a tiny kernel so we never hard-fail on older versions."""
    global _SINGLE_BUFFER_OK
    if _SINGLE_BUFFER_OK is not None:
        return _SINGLE_BUFFER_OK
    ok = False
    if hasattr(pl, "Buffered"):
        try:
            spec = pl.BlockSpec((8, 128), lambda i: (0, 0),
                                pipeline_mode=pl.Buffered(1))
            fn = pl.pallas_call(
                _probe_copy_kernel,
                out_shape=jax.ShapeDtypeStruct((8, 128), jnp.float32),
                grid_spec=pl.GridSpec(
                    grid=(1,),
                    in_specs=[spec],
                    out_specs=pl.BlockSpec((8, 128), lambda i: (0, 0)),
                ),
            )
            jax.block_until_ready(fn(jnp.zeros((8, 128), jnp.float32)))
            ok = True
        except Exception:
            ok = False
    _SINGLE_BUFFER_OK = ok
    return ok


def _resident_spec(shape):
    """BlockSpec for a weight/bias that is identical for every grid step
    (constant index_map; single-buffered when supported)."""
    index_map = lambda i: (0,) * len(shape)
    if _single_buffer_supported():
        return pl.BlockSpec(shape, index_map, pipeline_mode=pl.Buffered(1))
    return pl.BlockSpec(shape, index_map)


def _choose_tiling(B, F, N1, N2):
    """Pick (block_b, vmem_limit_bytes) from an explicit VMEM budget.

    Per-tile bytes ~ 2*bb*(F+N2)*4   (x/out f32, double buffered)
                   + (F*N1+N1*N2)*2  (bf16 weights; x2 if not single-buffered)
                   + (N1+N2)*4       (f32 biases)
                   + bb*max(N1,N2)*4 (hidden activation, compiler scratch)
    A ~24 MiB budget stays inside v7x's 64 MiB physical VMEM and well under the
    32 MiB scoped default; v5e/v6e (128 MiB) get the large-tile preference.
    """
    single_buf = _single_buffer_supported()

    def tile_bytes(bb):
        io = 2 * bb * (F + N2) * 4
        w = (F * N1 + N1 * N2) * 2
        if not single_buf:
            w *= 2
        w += (N1 + N2) * 4
        h = bb * max(N1, N2) * 4
        return io + w + h

    budget = 24 * 1024 * 1024
    bb = 1024                        # big tiles amortize per-step overhead (v5e/v6e)
    while bb > 8 and tile_bytes(bb) > budget:
        bb //= 2
    if B > 8:                        # v7x megacore: keep >= 2 "parallel" grid steps
        bb = min(bb, _round_up(pl.cdiv(B, 2), 8))
    bb = min(bb, _round_up(B, 8))
    bb = max(bb, 8)
    vmem_limit = int(min(96 * 1024 * 1024,
                         max(32 * 1024 * 1024, 2 * tile_bytes(bb))))
    return bb, vmem_limit


# -----------------------------------------------------------------------------
# Kernels
# -----------------------------------------------------------------------------
def _fused_mlp2_kernel(x_ref, w1_ref, b1_ref, w2_ref, b2_ref, o_ref):
    """relu(relu(x@W1+b1)@W2+b2); bf16 MXU inputs, f32 accumulation/bias/ReLU."""
    x = x_ref[...].astype(jnp.bfloat16)
    h = jnp.dot(x, w1_ref[...], preferred_element_type=jnp.float32)
    h = jnp.maximum(h + b1_ref[...], 0.0).astype(jnp.bfloat16)
    o = jnp.dot(h, w2_ref[...], preferred_element_type=jnp.float32)
    o = jnp.maximum(o + b2_ref[...], 0.0)
    o_ref[...] = o.astype(o_ref.dtype)


def _fused_mlp2_kernel_2out(x_ref, w1_ref, b1_ref, w2_ref, b2_ref, pi_ref, vf_ref):
    """Same compute; writes the pi / vf halves to two lane-aligned outputs."""
    x = x_ref[...].astype(jnp.bfloat16)
    h = jnp.dot(x, w1_ref[...], preferred_element_type=jnp.float32)
    h = jnp.maximum(h + b1_ref[...], 0.0).astype(jnp.bfloat16)
    o = jnp.dot(h, w2_ref[...], preferred_element_type=jnp.float32)
    o = jnp.maximum(o + b2_ref[...], 0.0)
    half = pi_ref.shape[-1]
    pi_ref[...] = o[:, :half].astype(pi_ref.dtype)
    vf_ref[...] = o[:, half:].astype(vf_ref.dtype)


def _run_fused_mlp(x, w1, b1, w2, b2, *, split_outputs=False):
    """x: (B,F) f32; w1: (F,N1) bf16; b1: (1,N1) f32; w2: (N1,N2) bf16; b2: (1,N2) f32."""
    B, F = x.shape
    N1 = w1.shape[1]
    N2 = w2.shape[1]
    bb, vmem_limit = _choose_tiling(B, F, N1, N2)
    grid = (pl.cdiv(B, bb),)         # ragged last batch tile is masked by Pallas

    in_specs = [
        pl.BlockSpec((bb, F), lambda i: (i, 0)),   # x tile (double-buffered)
        _resident_spec((F, N1)),                   # W1 (bf16, resident)
        _resident_spec((1, N1)),                   # b1 (f32, resident)
        _resident_spec((N1, N2)),                  # W2 (bf16, resident)
        _resident_spec((1, N2)),                   # b2 (f32, resident)
    ]
    if split_outputs:
        half = N2 // 2
        out_shape = (jax.ShapeDtypeStruct((B, half), x.dtype),
                     jax.ShapeDtypeStruct((B, half), x.dtype))
        out_specs = (pl.BlockSpec((bb, half), lambda i: (i, 0)),
                     pl.BlockSpec((bb, half), lambda i: (i, 0)))
        kernel = _fused_mlp2_kernel_2out
    else:
        out_shape = jax.ShapeDtypeStruct((B, N2), x.dtype)
        out_specs = pl.BlockSpec((bb, N2), lambda i: (i, 0))
        kernel = _fused_mlp2_kernel

    return pl.pallas_call(
        kernel,
        out_shape=out_shape,
        grid_spec=pl.GridSpec(grid=grid, in_specs=in_specs, out_specs=out_specs),
        compiler_params=pltpu.CompilerParams(
            dimension_semantics=("parallel",),
            vmem_limit_bytes=vmem_limit,
        ),
    )(x, w1, b1, w2, b2)


@jax.jit
def _forward_both_split(x, w1, b1, w2, b2):
    return _run_fused_mlp(x, w1, b1, w2, b2, split_outputs=True)


@jax.jit
def _forward_both_slice(x, w1, b1, w2, b2):
    out = _run_fused_mlp(x, w1, b1, w2, b2, split_outputs=False)
    half = out.shape[1] // 2
    return out[:, :half], out[:, half:]


@jax.jit
def _forward_single(x, w1, b1, w2, b2):
    return _run_fused_mlp(x, w1, b1, w2, b2, split_outputs=False)


@functools.partial(jax.jit, static_argnums=(5,))
def _forward_half_via_combined(x, w1, b1, w2, b2, take_vf):
    out = _run_fused_mlp(x, w1, b1, w2, b2, split_outputs=False)
    half = out.shape[1] // 2
    return out[:, half:] if take_vf else out[:, :half]


# -----------------------------------------------------------------------------
# Module
# -----------------------------------------------------------------------------
def _stack_block_diag(blocks):
    """(N, r, c) stacked blocks -> (N*r, N*c) block-diagonal matrix."""
    n, r, c = blocks.shape
    out = jnp.zeros((n * r, n * c), blocks.dtype)
    for i in range(n):
        out = out.at[i * r:(i + 1) * r, i * c:(i + 1) * c].set(blocks[i])
    return out


class MultiAgentMLPExtractorPallas:
    """JAX/Pallas port of MultiAgentMLPExtractor (shared-list net_arch, depth 2).

    All agents and both the pi/vf branches are fused into one block-diagonal
    matmul pair executed by a single pallas_call per forward.
    """
    # TODO(synk): dict-form net_arch ({"pi": [...], "vf": [...]}) and depths != 2
    #             are not implemented (only the shared 2-layer list form).
    # TODO(synk): once 2*num_agents*net_arch[0] grows past ~512 the dense
    #             block-diagonal packing wastes O(A^2) FLOPs/bytes; switch to an
    #             agent grid axis with per-agent (Fp,H1)/(H1,H2) weight BlockSpecs.

    def __init__(self, features_dim: int, net_arch, num_agents: int, key):
        assert isinstance(net_arch, (list, tuple)) and len(net_arch) == 2, \
            "this kernel implements a 2-layer shared net_arch"
        assert features_dim % num_agents == 0, \
            "features_dim must divide evenly over agents"
        self.num_agents = num_agents
        self.features_dim = features_dim
        self.features_dim_per_agent = features_dim // num_agents
        self.net_arch = list(net_arch)
        self.latent_dim_pi = net_arch[-1] * num_agents
        self.latent_dim_vf = net_arch[-1] * num_agents

        Fp, H1, H2 = self.features_dim_per_agent, net_arch[0], net_arch[1]
        A = num_agents
        keys = jax.random.split(key, 8)

        def init_w(k, shape, fan_in):
            bound = 1.0 / jnp.sqrt(jnp.float32(fan_in))
            return jax.random.uniform(k, shape, jnp.float32, -bound, bound)

        # Per-agent stacked f32 params (kept for the pure-JAX reference).
        self.pi_w1 = init_w(keys[0], (A, Fp, H1), Fp)
        self.pi_b1 = init_w(keys[1], (A, 1, H1), Fp)
        self.pi_w2 = init_w(keys[2], (A, H1, H2), H1)
        self.pi_b2 = init_w(keys[3], (A, 1, H2), H1)
        self.vf_w1 = init_w(keys[4], (A, Fp, H1), Fp)
        self.vf_b1 = init_w(keys[5], (A, 1, H1), Fp)
        self.vf_w2 = init_w(keys[6], (A, H1, H2), H1)
        self.vf_b2 = init_w(keys[7], (A, 1, H2), H1)

        # ---- Packed (block-diagonal) layouts, built once at init; bf16 weights. ----
        pi_w1_bd = _stack_block_diag(self.pi_w1)
        pi_w2_bd = _stack_block_diag(self.pi_w2)
        vf_w1_bd = _stack_block_diag(self.vf_w1)
        vf_w2_bd = _stack_block_diag(self.vf_w2)

        self.pi_w1_bd = pi_w1_bd.astype(jnp.bfloat16)     # (F, A*H1)
        self.pi_w2_bd = pi_w2_bd.astype(jnp.bfloat16)     # (A*H1, A*H2)
        self.vf_w1_bd = vf_w1_bd.astype(jnp.bfloat16)
        self.vf_w2_bd = vf_w2_bd.astype(jnp.bfloat16)
        self.pi_b1_cat = self.pi_b1.reshape(1, A * H1)    # f32 biases
        self.pi_b2_cat = self.pi_b2.reshape(1, A * H2)
        self.vf_b1_cat = self.vf_b1.reshape(1, A * H1)
        self.vf_b2_cat = self.vf_b2.reshape(1, A * H2)

        # Combined pi+vf: layer 1 shares x (concat along N); layer 2 block-diag.
        self.w1_all = jnp.concatenate([pi_w1_bd, vf_w1_bd], axis=1).astype(jnp.bfloat16)
        self.b1_all = jnp.concatenate([self.pi_b1_cat, self.vf_b1_cat], axis=1)
        w2_all = jnp.zeros((2 * A * H1, 2 * A * H2), jnp.float32)
        w2_all = w2_all.at[:A * H1, :A * H2].set(pi_w2_bd)
        w2_all = w2_all.at[A * H1:, A * H2:].set(vf_w2_bd)
        self.w2_all = w2_all.astype(jnp.bfloat16)
        self.b2_all = jnp.concatenate([self.pi_b2_cat, self.vf_b2_cat], axis=1)

        # pi/vf halves are 128-lane aligned -> write them straight from the kernel;
        # otherwise keep the single lane-dense combined slab and slice in XLA.
        self._split_outputs = (self.latent_dim_pi % 128 == 0)

    # ---- forward passes ----
    def forward(self, observations):
        if self._split_outputs:
            return _forward_both_split(observations, self.w1_all, self.b1_all,
                                       self.w2_all, self.b2_all)
        return _forward_both_slice(observations, self.w1_all, self.b1_all,
                                   self.w2_all, self.b2_all)

    def forward_actor(self, observations):
        if self._split_outputs:      # pi-only output is already lane-dense
            return _forward_single(observations, self.pi_w1_bd, self.pi_b1_cat,
                                   self.pi_w2_bd, self.pi_b2_cat)
        # A*H2 < 128: route through the 128-lane combined kernel, slice the pi half.
        return _forward_half_via_combined(observations, self.w1_all, self.b1_all,
                                          self.w2_all, self.b2_all, False)

    def forward_critic(self, observations):
        if self._split_outputs:
            return _forward_single(observations, self.vf_w1_bd, self.vf_b1_cat,
                                   self.vf_w2_bd, self.vf_b2_cat)
        return _forward_half_via_combined(observations, self.w1_all, self.b1_all,
                                          self.w2_all, self.b2_all, True)


# -----------------------------------------------------------------------------
# Pure-JAX references (per-agent, mirroring the PyTorch module structure)
# -----------------------------------------------------------------------------
def _split_per_agent(model, observations):
    B = observations.shape[0]
    A, Fp = model.num_agents, model.features_dim_per_agent
    return observations.reshape(B, A, Fp).transpose(1, 0, 2)  # (A, B, Fp)


def _concat_agents(y):  # (A, B, H) -> (B, A*H)
    a, b, h = y.shape
    return y.transpose(1, 0, 2).reshape(b, a * h)


def _reference_forward_f32(model, observations):
    """Full-f32 per-agent reference (mirrors the torch module)."""
    x = _split_per_agent(model, observations)
    hi = jax.lax.Precision.HIGHEST

    def net(x, w1, b1, w2, b2):
        h = jnp.maximum(jnp.einsum("abf,afh->abh", x, w1, precision=hi) + b1, 0.0)
        h = jnp.maximum(jnp.einsum("abh,ahk->abk", h, w2, precision=hi) + b2, 0.0)
        return h

    actor = _concat_agents(net(x, model.pi_w1, model.pi_b1, model.pi_w2, model.pi_b2))
    critic = _concat_agents(net(x, model.vf_w1, model.vf_b1, model.vf_w2, model.vf_b2))
    return actor, critic


def _reference_forward_matched(model, observations):
    """Per-agent reference at the kernel's precision (bf16 MXU inputs, f32 acc)."""
    x = _split_per_agent(model, observations).astype(jnp.bfloat16)

    def net(x, w1, b1, w2, b2):
        h = jnp.einsum("abf,afh->abh", x, w1.astype(jnp.bfloat16),
                       preferred_element_type=jnp.float32)
        h = jnp.maximum(h + b1, 0.0).astype(jnp.bfloat16)
        h = jnp.einsum("abh,ahk->abk", h, w2.astype(jnp.bfloat16),
                       preferred_element_type=jnp.float32)
        return jnp.maximum(h + b2, 0.0)

    actor = _concat_agents(net(x, model.pi_w1, model.pi_b1, model.pi_w2, model.pi_b2))
    critic = _concat_agents(net(x, model.vf_w1, model.vf_b1, model.vf_w2, model.vf_b2))
    return actor, critic


if __name__ == "__main__":
    key = jax.random.PRNGKey(0)
    k_param, k_obs, k_param2, k_obs2 = jax.random.split(key, 4)

    # ---- Config 1: A*H2 = 64 (< 128) -> combined 128-lane slab + XLA slice path.
    batch, num_agents, features_dim, net_arch = 8, 2, 32, [32, 32]
    model = MultiAgentMLPExtractorPallas(features_dim, net_arch, num_agents, k_param)
    obs = jax.random.normal(k_obs, (batch, features_dim), jnp.float32)

    actor, critic = jax.block_until_ready(model.forward(obs))
    assert actor.shape == (batch, model.latent_dim_pi), actor.shape
    assert critic.shape == (batch, model.latent_dim_vf), critic.shape
    actor_only = jax.block_until_ready(model.forward_actor(obs))
    critic_only = jax.block_until_ready(model.forward_critic(obs))

    ref_a32, ref_c32 = _reference_forward_f32(model, obs)
    ref_am, ref_cm = _reference_forward_matched(model, obs)
    for got in (actor, actor_only):
        assert jnp.allclose(got, ref_am, atol=1e-2, rtol=1e-2)
        assert jnp.allclose(got, ref_a32, atol=6e-2, rtol=6e-2)  # bf16-weight kernel vs f32 ref
    for got in (critic, critic_only):
        assert jnp.allclose(got, ref_cm, atol=1e-2, rtol=1e-2)
        assert jnp.allclose(got, ref_c32, atol=6e-2, rtol=6e-2)

    # Ragged batch (B not a multiple of 8) goes through the same cdiv grid.
    obs_r = obs[:6]
    a_r, c_r = jax.block_until_ready(model.forward(obs_r))
    assert jnp.allclose(a_r, ref_am[:6], atol=1e-2, rtol=1e-2)
    assert jnp.allclose(c_r, ref_cm[:6], atol=1e-2, rtol=1e-2)

    # ---- Config 2: A*H2 = 128 -> two lane-aligned outputs written by the kernel,
    # and lane-dense single-branch kernels for forward_actor / forward_critic.
    model2 = MultiAgentMLPExtractorPallas(32, [64, 64], 2, k_param2)
    obs2 = jax.random.normal(k_obs2, (8, 32), jnp.float32)
    a2, c2 = jax.block_until_ready(model2.forward(obs2))
    a2_only = jax.block_until_ready(model2.forward_actor(obs2))
    c2_only = jax.block_until_ready(model2.forward_critic(obs2))
    assert a2.shape == (8, model2.latent_dim_pi) and c2.shape == (8, model2.latent_dim_vf)
    r2_am, r2_cm = _reference_forward_matched(model2, obs2)
    assert jnp.allclose(a2, r2_am, atol=1e-2, rtol=1e-2)
    assert jnp.allclose(c2, r2_cm, atol=1e-2, rtol=1e-2)
    assert jnp.allclose(a2_only, r2_am, atol=1e-2, rtol=1e-2)
    assert jnp.allclose(c2_only, r2_cm, atol=1e-2, rtol=1e-2)

    print("KERNEL_OK")
</pallas_src>

<mosaic_0001>
module attributes {stable_mosaic.version = 11 : i64} {
  func.func @_fused_mlp2_kernel(%arg0: i32, %arg1: memref<8x32xf32, #tpu.memory_space<vmem>>, %arg2: memref<32x128xbf16, #tpu.memory_space<vmem>>, %arg3: memref<1x128xf32, #tpu.memory_space<vmem>>, %arg4: memref<128x128xbf16, #tpu.memory_space<vmem>>, %arg5: memref<1x128xf32, #tpu.memory_space<vmem>>, %arg6: memref<8x128xf32, #tpu.memory_space<vmem>>) attributes {dimension_semantics = [#tpu.dimension_semantics<parallel>], iteration_bounds = array<i64: 1>, scalar_prefetch = 0 : i64, scratch_operands = 0 : i64, tpu.core_type = #tpu.core_type<tc>, window_params = [{transform_indices = @transform_0, window_bounds = array<i64: 8, 32>}, {pipeline_mode = #tpu.pipeline_mode<synchronous>, transform_indices = @transform_1, window_bounds = array<i64: 32, 128>}, {pipeline_mode = #tpu.pipeline_mode<synchronous>, transform_indices = @transform_2, window_bounds = array<i64: 1, 128>}, {pipeline_mode = #tpu.pipeline_mode<synchronous>, transform_indices = @transform_3, window_bounds = array<i64: 128, 128>}, {pipeline_mode = #tpu.pipeline_mode<synchronous>, transform_indices = @transform_4, window_bounds = array<i64: 1, 128>}, {transform_indices = @transform_5, window_bounds = array<i64: 8, 128>}]} {
    %c0 = arith.constant 0 : index
    %c0_0 = arith.constant 0 : index
    %0 = vector.load %arg1[%c0, %c0_0] : memref<8x32xf32, #tpu.memory_space<vmem>>, vector<8x32xf32>
    %1 = arith.truncf %0 : vector<8x32xf32> to vector<8x32xbf16>
    %c0_1 = arith.constant 0 : index
    %c0_2 = arith.constant 0 : index
    %2 = vector.load %arg2[%c0_1, %c0_2] : memref<32x128xbf16, #tpu.memory_space<vmem>>, vector<32x128xbf16>
    %cst = arith.constant dense<0.000000e+00> : vector<8x128xf32>
    %3 = tpu.matmul %1, %2, %cst {dimension_numbers = #tpu.dot_dimension_numbers<[1], [0], [0], [1], [0, 0, 1, 1], [], []>} : vector<8x32xbf16>, vector<32x128xbf16>, vector<8x128xf32> -> vector<8x128xf32>
    %c0_3 = arith.constant 0 : index
    %c0_4 = arith.constant 0 : index
    %4 = vector.load %arg3[%c0_3, %c0_4] : memref<1x128xf32, #tpu.memory_space<vmem>>, vector<1x128xf32>
    %5 = vector.broadcast %4 : vector<1x128xf32> to vector<8x128xf32>
    %6 = arith.addf %3, %5 : vector<8x128xf32>
    %cst_5 = arith.constant 0.000000e+00 : f32
    %7 = vector.broadcast %cst_5 : f32 to vector<8x128xf32>
    %8 = arith.maximumf %6, %7 : vector<8x128xf32>
    %9 = arith.truncf %8 : vector<8x128xf32> to vector<8x128xbf16>
    %c0_6 = arith.constant 0 : index
    %c0_7 = arith.constant 0 : index
    %10 = vector.load %arg4[%c0_6, %c0_7] : memref<128x128xbf16, #tpu.memory_space<vmem>>, vector<128x128xbf16>
    %cst_8 = arith.constant dense<0.000000e+00> : vector<8x128xf32>
    %11 = tpu.matmul %9, %10, %cst_8 {dimension_numbers = #tpu.dot_dimension_numbers<[1], [0], [0], [1], [0, 0, 1, 1], [], []>} : vector<8x128xbf16>, vector<128x128xbf16>, vector<8x128xf32> -> vector<8x128xf32>
    %c0_9 = arith.constant 0 : index
    %c0_10 = arith.constant 0 : index
    %12 = vector.load %arg5[%c0_9, %c0_10] : memref<1x128xf32, #tpu.memory_space<vmem>>, vector<1x128xf32>
    %13 = vector.broadcast %12 : vector<1x128xf32> to vector<8x128xf32>
    %14 = arith.addf %11, %13 : vector<8x128xf32>
    %cst_11 = arith.constant 0.000000e+00 : f32
    %15 = vector.broadcast %cst_11 : f32 to vector<8x128xf32>
    %16 = arith.maximumf %14, %15 : vector<8x128xf32>
    %c0_12 = arith.constant 0 : index
    %c0_13 = arith.constant 0 : index
    %17 = vector.load %arg6[%c0_12, %c0_13] : memref<8x128xf32, #tpu.memory_space<vmem>>, vector<8x128xf32>
    tpu.vector_store %arg6[%c0_12, %c0_13], %16 {strides = array<i32>} : memref<8x128xf32, #tpu.memory_space<vmem>>, vector<8x128xf32>,
    return
  }
  func.func @transform_0(%arg0: i32) -> (i32, i32) {
    %c0_i32 = arith.constant 0 : i32
    %c0_i32_0 = arith.constant 0 : i32
    return %arg0, %c0_i32 : i32, i32
  }
  func.func @transform_1(%arg0: i32) -> (i32, i32) {
    %c0_i32 = arith.constant 0 : i32
    %c0_i32_0 = arith.constant 0 : i32
    %c0_i32_1 = arith.constant 0 : i32
    return %c0_i32, %c0_i32_0 : i32, i32
  }
  func.func @transform_2(%arg0: i32) -> (i32, i32) {
    %c0_i32 = arith.constant 0 : i32
    %c0_i32_0 = arith.constant 0 : i32
    %c0_i32_1 = arith.constant 0 : i32
    return %c0_i32, %c0_i32_0 : i32, i32
  }
  func.func @transform_3(%arg0: i32) -> (i32, i32) {
    %c0_i32 = arith.constant 0 : i32
    %c0_i32_0 = arith.constant 0 : i32
    %c0_i32_1 = arith.constant 0 : i32
    return %c0_i32, %c0_i32_0 : i32, i32
  }
  func.func @transform_4(%arg0: i32) -> (i32, i32) {
    %c0_i32 = arith.constant 0 : i32
    %c0_i32_0 = arith.constant 0 : i32
    %c0_i32_1 = arith.constant 0 : i32
    return %c0_i32, %c0_i32_0 : i32, i32
  }
  func.func @transform_5(%arg0: i32) -> (i32, i32) {
    %c0_i32 = arith.constant 0 : i32
    %c0_i32_0 = arith.constant 0 : i32
    return %arg0, %c0_i32 : i32, i32
  }
}

</mosaic_0001>

<llo_original>
// kernel: _forward_both_slice.1
$region0: #{_forward_both_slice.1}
  #allocation0 [shape = 'u32[]', space=smem, size = 0x4, offset = 0x4, fixed_abs, tag = 'smem constant byte address 0x4 - core index']
  #allocation1 [shape = 'u32[144,128]{1,0:T(1,128)}', space=vmem, size = 0x12000, scoped, tag = 'internal scratch']
  %s0 = inlined_call_operand.hbm [shape: f32[8,32], index: 0, kind: input, shape index: {}]
  %s1 = inlined_call_operand.hbm [shape: bf16[32,128], index: 1, kind: input, shape index: {}]
  %s2 = inlined_call_operand.vmem [shape: f32[1,128], index: 2, kind: input, shape index: {}]
  %s3 = inlined_call_operand.hbm [shape: bf16[128,128], index: 3, kind: input, shape index: {}]
  %s4 = inlined_call_operand.vmem [shape: f32[1,128], index: 4, kind: input, shape index: {}]
  %s5 = inlined_call_operand.vmem [shape: f32[8,128], index: 5, kind: output, shape index: {}]
  %s6 = sld [smem:[#allocation0]]
  $region42: #{_forward_both_slice.1} parent=0
    _
  %s8 = ssub.s32 1, %s6
  %s9 = scalar_select 0, %s8, %s6
  $region1: #{_forward_both_slice.1} parent=0
    #allocation2 [shape = 'u8[4096]{0}', space=vmem, size = 0x1000, scoped, tag = 'input window, operand 0, single buffered']
    #allocation3 [shape = 's32[1]{0}', space=sflag, size = 0x4, scoped, tag = 'scoped memory for _forward_both_slice.1']
    #allocation4 [shape = 'u8[8192]{0}', space=vmem, size = 0x2000, scoped, tag = 'input window, operand 1, single buffered']
    #allocation5 [shape = 's32[1]{0}', space=sflag, size = 0x4, scoped, tag = 'scoped memory for _forward_both_slice.1']
    #allocation6 [shape = 'u8[32768]{0}', space=vmem, size = 0x8000, scoped, tag = 'input window, operand 3, single buffered']
    %10 = vsyncpa [#allocation3], 0
    %11 = vsyncpa [#allocation5], 0
    // Predicated region
    $region2: #{_forward_both_slice.1} parent=1 // pred_check
      _
    $region3: #{_forward_both_slice.1} parent=1 // pred_check_branch
      %13 = sbr.rel (0) target = $region5
    $region4: #{_forward_both_slice.1} parent=1 // pred_region
      %s15 = ssub.s32 128, 128
      %16 = vsyncadd [#allocation3], %s15
      %s18 = sshll.u32 [#allocation2], 4
      %s19 = int_to_ptr.vmem [resolvable:$true] %s18
      %21 = dma.hbm_to_vmem [thread:$0]  %s0, 128, %s19, [#allocation3]
    $region5: #{_forward_both_slice.1} parent=1 // pred_fallthru
      _
    // Predicated region
    $region6: #{_forward_both_slice.1} parent=1 // pred_check
      _
    $region7: #{_forward_both_slice.1} parent=1 // pred_check_branch
      %23 = sbr.rel (0) target = $region9
    $region8: #{_forward_both_slice.1} parent=1 // pred_region
      %s25 = ssub.s32 256, 256
      %26 = vsyncadd [#allocation5], %s25
      %s27 = sshll.u32 [#allocation4], 4
      %s28 = int_to_ptr.vmem [resolvable:$true] %s27
      %33 = dma.hbm_to_vmem [thread:$0]  %s1, 256, %s28, [#allocation5], 64, 64, 4
    $region9: #{_forward_both_slice.1} parent=1 // pred_fallthru
      _
    // Predicated region
    $region10: #{_forward_both_slice.1} parent=1 // pred_check
      _
    $region11: #{_forward_both_slice.1} parent=1 // pred_check_branch
      %35 = sbr.rel (0) target = $region13
    $region12: #{_forward_both_slice.1} parent=1 // pred_region
      _
    $region13: #{_forward_both_slice.1} parent=1 // pred_fallthru
      _
    // Predicated region
    $region14: #{_forward_both_slice.1} parent=1 // pred_check
      _
    $region15: #{_forward_both_slice.1} parent=1 // pred_check_branch
      %37 = sbr.rel (0) target = $region17
    $region16: #{_forward_both_slice.1} parent=1 // pred_region
      %s39 = ssub.s32 1024, 1024
      %40 = vsyncadd [#allocation5], %s39
      %s41 = sshll.u32 [#allocation6], 4
      %s42 = int_to_ptr.vmem [resolvable:$true] %s41
      %47 = dma.hbm_to_vmem [thread:$0]  %s3, 1024, %s42, [#allocation5], 64, 64, 4
    $region17: #{_forward_both_slice.1} parent=1 // pred_fallthru
      _
    // Predicated region
    $region18: #{_forward_both_slice.1} parent=1 // pred_check
      _
    $region19: #{_forward_both_slice.1} parent=1 // pred_check_branch
      %49 = sbr.rel (0) target = $region21
    $region20: #{_forward_both_slice.1} parent=1 // pred_region
      _
    $region21: #{_forward_both_slice.1} parent=1 // pred_fallthru
      _
    // Predicated region
    $region22: #{_forward_both_slice.1} parent=1 // pred_check
      _
    $region23: #{_forward_both_slice.1} parent=1 // pred_check_branch
      %51 = sbr.rel (0) target = $region25
    $region24: #{_forward_both_slice.1} parent=1 // pred_region
      %52 = dma.done [#allocation3], 128
    $region25: #{_forward_both_slice.1} parent=1 // pred_fallthru
      _
    // Predicated region
    $region26: #{_forward_both_slice.1} parent=1 // pred_check
      _
    $region27: #{_forward_both_slice.1} parent=1 // pred_check_branch
      %54 = sbr.rel (0) target = $region29
    $region28: #{_forward_both_slice.1} parent=1 // pred_region
      %55 = dma.done [#allocation5], 256
    $region29: #{_forward_both_slice.1} parent=1 // pred_fallthru
      _
    // Predicated region
    $region30: #{_forward_both_slice.1} parent=1 // pred_check
      _
    $region31: #{_forward_both_slice.1} parent=1 // pred_check_branch
      %57 = sbr.rel (0) target = $region33
    $region32: #{_forward_both_slice.1} parent=1 // pred_region
      %58 = dma.done [#allocation5], 1024
    $region33: #{_forward_both_slice.1} parent=1 // pred_fallthru
      _
    %v60 = vld [vmem:[#allocation2] sm:$0xff]
    %v61 = vpack.c.bf16 %v60, %v60
    %v62 = vld [vmem:[#allocation4] sm:$0xf]
    %v63 = vld [vmem:[#allocation4 + $0x4] sm:$0xf]
    %v64 = vld [vmem:[#allocation4 + $0x8] sm:$0xf]
    %v65 = vld [vmem:[#allocation4 + $0xc] sm:$0xf]
    %v66 = vld [vmem:[%s2] sm:$0x1]
    %v68 = vlaneseq
    %v69 = vshrl.u32 %v68, 7
    %v70 = vsub.s32 0, %v69
    %v71 = vrot.slane %v66, %v70
    %v77 = vunpack.c.l.b16 %v62
    %v78 = vunpack.c.l.b16 %v63
    %v79 = vunpack.c.l.b16 %v64
    %v80 = vunpack.c.l.b16 %v65
    %v81 = vpack.c.b16 %v78, %v77
    %v82 = vpack.c.b16 %v80, %v79
    %vm85 = vcmask 261120
    %v87 = vsel %vm85, %v61, 0
    %89 = vmatprep.subr.bf16.mxu0 0
    %90 = vmatpush1.bf16.msra.mxu0 %v81
    %91 = vmatprep.subr.bf16.mxu0 0
    %92 = vmatpush1.bf16.msra.mxu0 %v82
    %93 = vmatprep.subr.bf16.mxu0 0
    %94 = vmatpush1.bf16.msra.mxu0 0
    %95 = vmatprep.subr.bf16.mxu0 0
    %96 = vmatpush1.bf16.msra.mxu0 0
    %97 = vmatprep.subr.bf16.mxu0 0
    %98 = vmatpush1.bf16.msra.mxu0 0
    %99 = vmatprep.subr.bf16.mxu0 0
    %100 = vmatpush1.bf16.msra.mxu0 0
    %101 = vmatprep.subr.bf16.mxu0 0
    %102 = vmatpush1.bf16.msra.mxu0 0
    %103 = vmatprep.subr.bf16.mxu0 0
    %104 = vmatpush1.bf16.msra.mxu0 0
    %105 = vmatprep.subr.bf16.mxu0 0
    %106 = vmatpush1.bf16.msra.mxu0 0
    %107 = vmatprep.subr.bf16.mxu0 0
    %108 = vmatpush1.bf16.msra.mxu0 0
    %109 = vmatprep.subr.bf16.mxu0 0
    %110 = vmatpush1.bf16.msra.mxu0 0
    %111 = vmatprep.subr.bf16.mxu0 0
    %112 = vmatpush1.bf16.msra.mxu0 0
    %113 = vmatprep.subr.bf16.mxu0 0
    %114 = vmatpush1.bf16.msra.mxu0 0
    %115 = vmatprep.subr.bf16.mxu0 0
    %116 = vmatpush1.bf16.msra.mxu0 0
    %117 = vmatprep.subr.bf16.mxu0 0
    %118 = vmatpush1.bf16.msra.mxu0 0
    %119 = vmatprep.subr.bf16.mxu0 0
    %120 = vmatpush1.bf16.msra.mxu0 0
    %121 = vmatprep.mubr.bf16.mxu0 0
    %122 = vmatmul.mubr.bf16.gmra.mrb[0].mxu0 %v87
    %v123 = vpop.f32.mrb[0].mxu0
    %v124 = vadd.f32 %v71, %v123
    %v125 = vpop.f32.mrb[0].mxu0
    %v126 = vpop.f32.mrb[0].mxu0
    %v127 = vpop.f32.mrb[0].mxu0
    %128 = vdwg.mxu0
    %v129 = vmax.f32 %v124, 0.0
    %v130 = vpack.c.bf16 %v129, %v129
    %v131 = vld [vmem:[#allocation6] sm:$0xf]
    %v132 = vld [vmem:[#allocation6 + $0x4] sm:$0xf]
    %v133 = vld [vmem:[#allocation6 + $0x8] sm:$0xf]
    %v134 = vld [vmem:[#allocation6 + $0xc] sm:$0xf]
    %v135 = vld [vmem:[#allocation6 + $0x10] sm:$0xf]
    %v136 = vld [vmem:[#allocation6 + $0x14] sm:$0xf]
    %v137 = vld [vmem:[#allocation6 + $0x18] sm:$0xf]
    %v138 = vld [vmem:[#allocation6 + $0x1c] sm:$0xf]
    %v139 = vld [vmem:[#allocation6 + $0x20] sm:$0xf]
    %v140 = vld [vmem:[#allocation6 + $0x24] sm:$0xf]
    %v141 = vld [vmem:[#allocation6 + $0x28] sm:$0xf]
    %v142 = vld [vmem:[#allocation6 + $0x2c] sm:$0xf]
    %v143 = vld [vmem:[#allocation6 + $0x30] sm:$0xf]
    %v144 = vld [vmem:[#allocation6 + $0x34] sm:$0xf]
    %v145 = vld [vmem:[#allocation6 + $0x38] sm:$0xf]
    %v146 = vld [vmem:[#allocation6 + $0x3c] sm:$0xf]
    %v147 = vld [vmem:[%s4] sm:$0x1]
    %v149 = vlaneseq
    %v150 = vshrl.u32 %v149, 7
    %v151 = vsub.s32 0, %v150
    %v152 = vrot.slane %v147, %v151
    %v170 = vunpack.c.l.b16 %v131
    %v171 = vunpack.c.l.b16 %v132
    %v172 = vunpack.c.l.b16 %v133
    %v173 = vunpack.c.l.b16 %v134
    %v174 = vunpack.c.l.b16 %v135
    %v175 = vunpack.c.l.b16 %v136
    %v176 = vunpack.c.l.b16 %v137
    %v177 = vunpack.c.l.b16 %v138
    %v178 = vunpack.c.l.b16 %v139
    %v179 = vunpack.c.l.b16 %v140
    %v180 = vunpack.c.l.b16 %v141
    %v181 = vunpack.c.l.b16 %v142
    %v182 = vunpack.c.l.b16 %v143
    %v183 = vunpack.c.l.b16 %v144
    %v184 = vunpack.c.l.b16 %v145
    %v185 = vunpack.c.l.b16 %v146
    %v186 = vpack.c.b16 %v171, %v170
    %v187 = vpack.c.b16 %v173, %v172
    %v188 = vpack.c.b16 %v175, %v174
    %v189 = vpack.c.b16 %v177, %v176
    %v190 = vpack.c.b16 %v179, %v178
    %v191 = vpack.c.b16 %v181, %v180
    %v192 = vpack.c.b16 %v183, %v182
    %v193 = vpack.c.b16 %v185, %v184
    %202 = vmatprep.subr.bf16.mxu0 0
    %203 = vmatpush1.bf16.msra.mxu0 %v186
    %204 = vmatprep.subr.bf16.mxu0 0
    %205 = vmatpush1.bf16.msra.mxu0 %v187
    %206 = vmatprep.subr.bf16.mxu0 0
    %207 = vmatpush1.bf16.msra.mxu0 %v188
    %208 = vmatprep.subr.bf16.mxu0 0
    %209 = vmatpush1.bf16.msra.mxu0 %v189
    %210 = vmatprep.subr.bf16.mxu0 0
    %211 = vmatpush1.bf16.msra.mxu0 %v190
    %212 = vmatprep.subr.bf16.mxu0 0
    %213 = vmatpush1.bf16.msra.mxu0 %v191
    %214 = vmatprep.subr.bf16.mxu0 0
    %215 = vmatpush1.bf16.msra.mxu0 %v192
    %216 = vmatprep.subr.bf16.mxu0 0
    %217 = vmatpush1.bf16.msra.mxu0 %v193
    %218 = vmatprep.subr.bf16.mxu0 0
    %219 = vmatpush1.bf16.msra.mxu0 0
    %220 = vmatprep.subr.bf16.mxu0 0
    %221 = vmatpush1.bf16.msra.mxu0 0
    %222 = vmatprep.subr.bf16.mxu0 0
    %223 = vmatpush1.bf16.msra.mxu0 0
    %224 = vmatprep.subr.bf16.mxu0 0
    %225 = vmatpush1.bf16.msra.mxu0 0
    %226 = vmatprep.subr.bf16.mxu0 0
    %227 = vmatpush1.bf16.msra.mxu0 0
    %228 = vmatprep.subr.bf16.mxu0 0
    %229 = vmatpush1.bf16.msra.mxu0 0
    %230 = vmatprep.subr.bf16.mxu0 0
    %231 = vmatpush1.bf16.msra.mxu0 0
    %232 = vmatprep.subr.bf16.mxu0 0
    %233 = vmatpush1.bf16.msra.mxu0 0
    %234 = vmatprep.mubr.bf16.mxu0 0
    %235 = vmatmul.mubr.bf16.gmra.mrb[0].mxu0 %v130
    %v236 = vpop.f32.mrb[0].mxu0
    %v237 = vadd.f32 %v152, %v236
    %v238 = vpop.f32.mrb[0].mxu0
    %v239 = vpop.f32.mrb[0].mxu0
    %v240 = vpop.f32.mrb[0].mxu0
    %241 = vdwg.mxu0
    %v242 = vmax.f32 %v237, 0.0
    %243 = vst [vmem:[%s5] sm:$0xff] %v242
    // Predicated region
    $region34: #{_forward_both_slice.1} parent=1 // pred_check
      _
    $region35: #{_forward_both_slice.1} parent=1 // pred_check_branch
      %245 = sbr.rel (0) target = $region37
    $region36: #{_forward_both_slice.1} parent=1 // pred_region
      _
    $region37: #{_forward_both_slice.1} parent=1 // pred_fallthru
      _
    // Predicated region
    $region38: #{_forward_both_slice.1} parent=1 // pred_check
      _
    $region39: #{_forward_both_slice.1} parent=1 // pred_check_branch
      %247 = sbr.rel (0) target = $region41
    $region40: #{_forward_both_slice.1} parent=1 // pred_region
      _
    $region41: #{_forward_both_slice.1} parent=1 // pred_fallthru
      _
    %248 = vsyncpa [#allocation3], 1
    %249 = vsyncpa [#allocation5], 1

</llo_original>
